<compile_context>
chip_gen: v5e
topology: v5e:2x2
jax: 0.10.0
libtpu: 0.0.40
codegen_flags: <defaults>
</compile_context>

<pallas_src>
import functools

import numpy as np
import jax
import jax.numpy as jnp
from jax.experimental import pallas as pl
from jax.experimental.pallas import tpu as pltpu


def _round_up(a, b):
    return ((a + b - 1) // b) * b


# ----------------------------- kernels --------------------------------------

def _fc_kernel_resident(x_ref, w_ref, s_ref, b_ref, o_ref, *, apply_relu):
    """Whole K resident in VMEM: single MXU pass, f32 epilogue, bf16 store."""
    acc = jnp.dot(x_ref[...], w_ref[...], preferred_element_type=jnp.float32)
    y = acc * s_ref[...] + b_ref[...]          # (tm,tn)*(1,tn)+(1,tn), f32 VPU
    if apply_relu:
        y = jnp.maximum(y, 0.0)
    o_ref[...] = y.astype(o_ref.dtype)


def _fc_kernel_reduce(x_ref, w_ref, s_ref, b_ref, o_ref, acc_ref, *, apply_relu):
    """K tiled as innermost (reduction) grid axis with an f32 VMEM accumulator."""
    @pl.when(pl.program_id(2) == 0)
    def _():
        acc_ref[...] = jnp.zeros_like(acc_ref)

    acc_ref[...] += jnp.dot(x_ref[...], w_ref[...],
                            preferred_element_type=jnp.float32)

    @pl.when(pl.program_id(2) == pl.num_programs(2) - 1)
    def _():
        y = acc_ref[...] * s_ref[...] + b_ref[...]
        if apply_relu:
            y = jnp.maximum(y, 0.0)
        o_ref[...] = y.astype(o_ref.dtype)


# ------------------------ one-time weight prep -------------------------------

def _pick_n_tile(n_out):
    np_ = _round_up(n_out, 128)
    if np_ % 512 == 0:
        return np_, 512
    if np_ % 256 == 0:
        return np_, 256
    if np_ >= 512:
        np_ = _round_up(n_out, 256)     # modest extra zero-pad to fill 256-wide MXU
        return np_, (512 if np_ % 512 == 0 else 256)
    return np_, 128                     # small dim_out: keep padding minimal


def prepare_fc_params(w, b, bn=None, *, use_bn=True, mxu_dtype=jnp.bfloat16):
    """One-time weight preparation (hoisted out of the per-forward hot path).

    w: (dim_out, dim_in) Linear weight; b: (dim_out,) Linear bias;
    bn: dict(gamma, beta, mean, var) -- inference-mode BatchNorm1d statistics.
    Cache the returned dict and reuse it for every forward call.
    """
    n_out, K = int(w.shape[0]), int(w.shape[1])
    Np, tn = _pick_n_tile(n_out)
    Kp = _round_up(K, 128)

    # Weights stay unscaled in bf16; BN scale is applied in f32 in the epilogue.
    w_p = jnp.zeros((Kp, Np), mxu_dtype).at[:K, :n_out].set(
        jnp.transpose(w).astype(mxu_dtype))

    if use_bn and bn is not None:
        scale = (bn["gamma"] / jnp.sqrt(bn["var"] + 1e-5)).astype(jnp.float32)
        bias = ((b - bn["mean"]) * scale + bn["beta"]).astype(jnp.float32)
    else:
        scale = jnp.ones((n_out,), jnp.float32)
        bias = b.astype(jnp.float32)
    s_p = jnp.zeros((1, Np), jnp.float32).at[0, :n_out].set(scale)
    b_p = jnp.zeros((1, Np), jnp.float32).at[0, :n_out].set(bias)

    return dict(w_p=w_p, s_p=s_p, b_p=b_p,
                n_out=n_out, K=K, Kp=Kp, Np=Np, tn=tn)


# ------------------------------ forward --------------------------------------

def fc_forward(x, params, n_c=None, *, apply_relu=True, dp=0.0,
               mxu_dtype=jnp.bfloat16, out_dtype=jnp.bfloat16):
    """Pallas FC.forward(x, n_c): flatten -> Linear -> BN(eval) -> ReLU.

    TODO(synk): training-mode BatchNorm (batch stats) and training-mode Dropout
    (dp > 0) are not implemented; behaves as module.eval() (dropout = identity).
    """
    del n_c, dp
    if x.ndim != 2:                      # mirrors `if x.dim() != 2: x = x.flatten(1)`
        x = x.reshape(x.shape[0], -1)
    M, K = x.shape
    assert K == params["K"], (K, params["K"])
    Kp, Np, tn, n_out = params["Kp"], params["Np"], params["tn"], params["n_out"]
    w_p, s_p, b_p = params["w_p"], params["s_p"], params["b_p"]

    # M tile: bf16 packs 16 sublanes per vreg -> round to 16; cap at 256.
    if M <= 256:
        tm = _round_up(M, 16)
        Mp = tm
    else:
        tm = 256
        Mp = _round_up(M, tm)

    x_p = jnp.zeros((Mp, Kp), mxu_dtype).at[:M, :K].set(x.astype(mxu_dtype))

    in_b = jnp.dtype(mxu_dtype).itemsize
    out_b = jnp.dtype(out_dtype).itemsize

    # Resident-K double-buffered footprint.
    resident_bytes = (2 * (tm * Kp + Kp * tn) * in_b
                      + 2 * tm * tn * out_b + 4 * Np * 4)

    if resident_bytes <= (20 << 20):
        # --- resident-K path: grid (M, N); no accumulator, no init/finalize ---
        grid = (Mp // tm, Np // tn)
        kernel = functools.partial(_fc_kernel_resident, apply_relu=apply_relu)
        in_specs = [
            pl.BlockSpec((tm, Kp), lambda i, j: (i, 0)),   # x resident across N tiles
            pl.BlockSpec((Kp, tn), lambda i, j: (0, j)),   # weight stream
            pl.BlockSpec((1, tn), lambda i, j: (0, j)),    # BN scale (f32)
            pl.BlockSpec((1, tn), lambda i, j: (0, j)),    # bias (f32)
        ]
        out_specs = pl.BlockSpec((tm, tn), lambda i, j: (i, j))
        scratch_shapes = []
        dims = ("parallel", "parallel")
        vmem_need = resident_bytes
    else:
        # --- K-reduction path: grid (M, N, K) with f32 accumulator ---
        tk = 128
        for cand in (2048, 1024, 512, 256, 128):
            if Kp % cand == 0:
                tk = cand
                break
        grid = (Mp // tm, Np // tn, Kp // tk)
        kernel = functools.partial(_fc_kernel_reduce, apply_relu=apply_relu)
        # Small-M = weight-bandwidth bound: deepen prefetch on the weight stream.
        w_buf = 3 if (Mp // tm == 1 and Kp // tk >= 3) else 2
        if w_buf == 3:
            w_spec = pl.BlockSpec((tk, tn), lambda i, j, k: (k, j),
                                  pipeline_mode=pl.Buffered(3))
        else:
            w_spec = pl.BlockSpec((tk, tn), lambda i, j, k: (k, j))
        in_specs = [
            pl.BlockSpec((tm, tk), lambda i, j, k: (i, k)),
            w_spec,
            pl.BlockSpec((1, tn), lambda i, j, k: (0, j)),
            pl.BlockSpec((1, tn), lambda i, j, k: (0, j)),
        ]
        out_specs = pl.BlockSpec((tm, tn), lambda i, j, k: (i, j))
        scratch_shapes = [pltpu.VMEM((tm, tn), jnp.float32)]
        dims = ("parallel", "parallel", "arbitrary")
        vmem_need = (2 * tm * tk * in_b + w_buf * tk * tn * in_b
                     + 2 * tm * tn * out_b + tm * tn * 4 + 4 * Np * 4)

    # Explicit VMEM budget (safe on v7x's 64 MiB, v5e/v6e's 128 MiB).
    vmem_limit = int(min(max(vmem_need + (4 << 20), 16 << 20), 32 << 20))

    out_p = pl.pallas_call(
        kernel,
        out_shape=jax.ShapeDtypeStruct((Mp, Np), out_dtype),
        grid_spec=pltpu.PrefetchScalarGridSpec(
            num_scalar_prefetch=0,
            grid=grid,
            in_specs=in_specs,
            out_specs=out_specs,
            scratch_shapes=scratch_shapes,
        ),
        compiler_params=pltpu.CompilerParams(
            dimension_semantics=dims,
            vmem_limit_bytes=vmem_limit),
    )(x_p, w_p, s_p, b_p)

    return out_p[:M, :n_out]


# ------------------------------ reference ------------------------------------

def _reference_f32(x, w, b, bn, use_bn, apply_relu):
    """Pure-f32 JAX reference of the PyTorch FC module in eval mode."""
    if x.ndim != 2:
        x = x.reshape(x.shape[0], -1)
    y = x @ w.T + b
    if use_bn:
        y = (y - bn["mean"]) / jnp.sqrt(bn["var"] + 1e-5) * bn["gamma"] + bn["beta"]
    if apply_relu:
        y = jnp.maximum(y, 0.0)
    return y


if __name__ == "__main__":
    key = jax.random.PRNGKey(0)
    kx, kw, kb, kg, kbe, km, kv, kx2, kw2, kb2 = jax.random.split(key, 10)

    # Case 1: x (2,4,16,16) flattened -> (2,1024); FC(1024 -> 32), use_bn=True.
    N, C, H, W = 2, 4, 16, 16
    dim_in, dim_out = C * H * W, 32
    x = jax.random.normal(kx, (N, C, H, W), jnp.float32)
    w = jax.random.normal(kw, (dim_out, dim_in), jnp.float32) * 0.05
    b = jax.random.normal(kb, (dim_out,), jnp.float32) * 0.1
    bn = dict(
        gamma=1.0 + 0.2 * (jax.random.uniform(kg, (dim_out,)) - 0.5),
        beta=0.2 * (jax.random.uniform(kbe, (dim_out,)) - 0.5),
        mean=0.2 * (jax.random.uniform(km, (dim_out,)) - 0.5),
        var=0.5 + jax.random.uniform(kv, (dim_out,)),
    )

    params = prepare_fc_params(w, b, bn, use_bn=True)      # hoisted: cache + reuse
    y = jax.block_until_ready(fc_forward(x, params, apply_relu=True, dp=0.0))
    ref = _reference_f32(x, w, b, bn, use_bn=True, apply_relu=True)
    assert y.shape == (N, dim_out)
    assert np.allclose(np.asarray(y.astype(jnp.float32)), np.asarray(ref),
                       rtol=5e-2, atol=5e-2)

    # Case 2: 2-D input, no BN, larger tiles + multi-block parallel grid.
    M2, dim_in2, dim_out2 = 300, 256, 512
    x2 = jax.random.normal(kx2, (M2, dim_in2), jnp.float32)
    w2 = jax.random.normal(kw2, (dim_out2, dim_in2), jnp.float32) * 0.05
    b2 = jax.random.normal(kb2, (dim_out2,), jnp.float32) * 0.1
    params2 = prepare_fc_params(w2, b2, None, use_bn=False)
    y2 = jax.block_until_ready(fc_forward(x2, params2, apply_relu=True))
    ref2 = _reference_f32(x2, w2, b2, None, use_bn=False, apply_relu=True)
    assert y2.shape == (M2, dim_out2)
    assert np.allclose(np.asarray(y2.astype(jnp.float32)), np.asarray(ref2),
                       rtol=5e-2, atol=5e-2)

    print("KERNEL_OK")
</pallas_src>

<mosaic_0001>
module attributes {stable_mosaic.version = 11 : i64} {
  func.func @_fc_kernel_resident(%arg0: i32, %arg1: i32, %arg2: memref<16x1024xbf16, #tpu.memory_space<vmem>>, %arg3: memref<1024x128xbf16, #tpu.memory_space<vmem>>, %arg4: memref<1x128xf32, #tpu.memory_space<vmem>>, %arg5: memref<1x128xf32, #tpu.memory_space<vmem>>, %arg6: memref<16x128xbf16, #tpu.memory_space<vmem>>) attributes {dimension_semantics = [#tpu.dimension_semantics<parallel>, #tpu.dimension_semantics<parallel>], iteration_bounds = array<i64: 1, 1>, scalar_prefetch = 0 : i64, scratch_operands = 0 : i64, tpu.core_type = #tpu.core_type<tc>, window_params = [{transform_indices = @transform_0, window_bounds = array<i64: 16, 1024>}, {transform_indices = @transform_1, window_bounds = array<i64: 1024, 128>}, {transform_indices = @transform_2, window_bounds = array<i64: 1, 128>}, {transform_indices = @transform_3, window_bounds = array<i64: 1, 128>}, {transform_indices = @transform_4, window_bounds = array<i64: 16, 128>}]} {
    %c0 = arith.constant 0 : index
    %c0_0 = arith.constant 0 : index
    %0 = vector.load %arg2[%c0, %c0_0] : memref<16x1024xbf16, #tpu.memory_space<vmem>>, vector<16x1024xbf16>
    %c0_1 = arith.constant 0 : index
    %c0_2 = arith.constant 0 : index
    %1 = vector.load %arg3[%c0_1, %c0_2] : memref<1024x128xbf16, #tpu.memory_space<vmem>>, vector<1024x128xbf16>
    %cst = arith.constant dense<0.000000e+00> : vector<16x128xf32>
    %2 = tpu.matmul %0, %1, %cst {dimension_numbers = #tpu.dot_dimension_numbers<[1], [0], [0], [1], [0, 0, 1, 1], [], []>} : vector<16x1024xbf16>, vector<1024x128xbf16>, vector<16x128xf32> -> vector<16x128xf32>
    %c0_3 = arith.constant 0 : index
    %c0_4 = arith.constant 0 : index
    %3 = vector.load %arg4[%c0_3, %c0_4] : memref<1x128xf32, #tpu.memory_space<vmem>>, vector<1x128xf32>
    %4 = vector.broadcast %3 : vector<1x128xf32> to vector<16x128xf32>
    %5 = arith.mulf %2, %4 : vector<16x128xf32>
    %c0_5 = arith.constant 0 : index
    %c0_6 = arith.constant 0 : index
    %6 = vector.load %arg5[%c0_5, %c0_6] : memref<1x128xf32, #tpu.memory_space<vmem>>, vector<1x128xf32>
    %7 = vector.broadcast %6 : vector<1x128xf32> to vector<16x128xf32>
    %8 = arith.addf %5, %7 : vector<16x128xf32>
    %cst_7 = arith.constant 0.000000e+00 : f32
    %9 = vector.broadcast %cst_7 : f32 to vector<16x128xf32>
    %10 = arith.maximumf %8, %9 : vector<16x128xf32>
    %11 = arith.truncf %10 : vector<16x128xf32> to vector<16x128xbf16>
    %c0_8 = arith.constant 0 : index
    %c0_9 = arith.constant 0 : index
    %12 = vector.load %arg6[%c0_8, %c0_9] : memref<16x128xbf16, #tpu.memory_space<vmem>>, vector<16x128xbf16>
    tpu.vector_store %arg6[%c0_8, %c0_9], %11 {strides = array<i32>} : memref<16x128xbf16, #tpu.memory_space<vmem>>, vector<16x128xbf16>,
    return
  }
  func.func @transform_0(%arg0: i32, %arg1: i32) -> (i32, i32) {
    %c0_i32 = arith.constant 0 : i32
    %c0_i32_0 = arith.constant 0 : i32
    return %arg0, %c0_i32 : i32, i32
  }
  func.func @transform_1(%arg0: i32, %arg1: i32) -> (i32, i32) {
    %c0_i32 = arith.constant 0 : i32
    %c0_i32_0 = arith.constant 0 : i32
    return %c0_i32, %arg1 : i32, i32
  }
  func.func @transform_2(%arg0: i32, %arg1: i32) -> (i32, i32) {
    %c0_i32 = arith.constant 0 : i32
    %c0_i32_0 = arith.constant 0 : i32
    return %c0_i32, %arg1 : i32, i32
  }
  func.func @transform_3(%arg0: i32, %arg1: i32) -> (i32, i32) {
    %c0_i32 = arith.constant 0 : i32
    %c0_i32_0 = arith.constant 0 : i32
    return %c0_i32, %arg1 : i32, i32
  }
  func.func @transform_4(%arg0: i32, %arg1: i32) -> (i32, i32) {
    %c0_i32 = arith.constant 0 : i32
    return %arg0, %arg1 : i32, i32
  }
}

</mosaic_0001>

<llo_original>
// kernel: tpu_custom_call.1
$region0: #{tpu_custom_call.1}
  #allocation0 [shape = 'u32[]', space=smem, size = 0x4, offset = 0x4, fixed_abs, tag = 'smem constant byte address 0x4 - core index']
  #allocation1 [shape = 'u32[72,128]{1,0:T(1,128)}', space=vmem, size = 0x9000, scoped, tag = 'internal scratch']
  %s0 = inlined_call_operand.hbm [shape: bf16[16,1024], index: 0, kind: input, shape index: {}]
  %s1 = inlined_call_operand.hbm [shape: bf16[1024,128], index: 1, kind: input, shape index: {}]
  %s2 = inlined_call_operand.vmem [shape: f32[1,128], index: 2, kind: input, shape index: {}]
  %s3 = inlined_call_operand.vmem [shape: f32[1,128], index: 3, kind: input, shape index: {}]
  %s4 = inlined_call_operand.hbm [shape: bf16[16,128], index: 4, kind: output, shape index: {}]
  %s5 = sld [smem:[#allocation0]]
  $region34: #{tpu_custom_call.1} parent=0
    _
  %s7 = ssub.s32 1, %s5
  %s8 = scalar_select 0, %s7, %s5
  $region1: #{tpu_custom_call.1} parent=0
    #allocation2 [shape = 'u8[32768]{0}', space=vmem, size = 0x8000, scoped, tag = 'input window, operand 0, single buffered']
    #allocation3 [shape = 's32[1]{0}', space=sflag, size = 0x4, scoped, tag = 'scoped memory for tpu_custom_call.1']
    #allocation4 [shape = 's32[1]{0}', space=sflag, size = 0x4, scoped, tag = 'scoped memory for tpu_custom_call.1']
    #allocation5 [shape = 'u8[262144]{0}', space=vmem, size = 0x40000, scoped, tag = 'input window, operand 1, single buffered']
    #allocation6 [shape = 's32[1]{0}', space=sflag, size = 0x4, scoped, tag = 'scoped memory for tpu_custom_call.1']
    #allocation7 [shape = 'u8[4096]{0}', space=vmem, size = 0x1000, scoped, tag = 'output window, operand 0, single buffered']
    %9 = vsyncpa [#allocation3], 0
    %10 = vsyncpa [#allocation6], 0
    %11 = vsyncpa [#allocation4], 0
    // Predicated region
    $region2: #{tpu_custom_call.1} parent=1 // pred_check
      _
    $region3: #{tpu_custom_call.1} parent=1 // pred_check_branch
      %13 = sbr.rel (0) target = $region5
    $region4: #{tpu_custom_call.1} parent=1 // pred_region
      %15 = vsyncadd [#allocation3], 0
      %s16 = sshll.u32 %s0, 4
      %s17 = int_to_ptr.hbm [resolvable:$true] %s16
      %s18 = sshll.u32 [#allocation2], 4
      %s19 = int_to_ptr.vmem [resolvable:$true] %s18
      %24 = dma.hbm_to_vmem [thread:$0]  %s17, 1024, %s19, [#allocation3], 512, 512, 32
    $region5: #{tpu_custom_call.1} parent=1 // pred_fallthru
      _
    // Predicated region
    $region6: #{tpu_custom_call.1} parent=1 // pred_check
      _
    $region7: #{tpu_custom_call.1} parent=1 // pred_check_branch
      %26 = sbr.rel (0) target = $region9
    $region8: #{tpu_custom_call.1} parent=1 // pred_region
      %28 = vsyncadd [#allocation6], 0
      %s29 = sshll.u32 %s1, 4
      %s30 = int_to_ptr.hbm [resolvable:$true] %s29
      %s31 = sshll.u32 [#allocation5], 4
      %s32 = int_to_ptr.vmem [resolvable:$true] %s31
      %37 = dma.hbm_to_vmem [thread:$0]  %s30, 8192, %s32, [#allocation6], 64, 64, 4
    $region9: #{tpu_custom_call.1} parent=1 // pred_fallthru
      _
    // Predicated region
    $region10: #{tpu_custom_call.1} parent=1 // pred_check
      _
    $region11: #{tpu_custom_call.1} parent=1 // pred_check_branch
      %39 = sbr.rel (0) target = $region13
    $region12: #{tpu_custom_call.1} parent=1 // pred_region
      _
    $region13: #{tpu_custom_call.1} parent=1 // pred_fallthru
      _
    // Predicated region
    $region14: #{tpu_custom_call.1} parent=1 // pred_check
      _
    $region15: #{tpu_custom_call.1} parent=1 // pred_check_branch
      %41 = sbr.rel (0) target = $region17
    $region16: #{tpu_custom_call.1} parent=1 // pred_region
      _
    $region17: #{tpu_custom_call.1} parent=1 // pred_fallthru
      _
    // Predicated region
    $region18: #{tpu_custom_call.1} parent=1 // pred_check
      _
    $region19: #{tpu_custom_call.1} parent=1 // pred_check_branch
      %43 = sbr.rel (0) target = $region21
    $region20: #{tpu_custom_call.1} parent=1 // pred_region
      %45 = dma.done [#allocation3], 1024
    $region21: #{tpu_custom_call.1} parent=1 // pred_fallthru
      _
    // Predicated region
    $region22: #{tpu_custom_call.1} parent=1 // pred_check
      _
    $region23: #{tpu_custom_call.1} parent=1 // pred_check_branch
      %47 = sbr.rel (0) target = $region25
    $region24: #{tpu_custom_call.1} parent=1 // pred_region
      %49 = dma.done [#allocation6], 8192
    $region25: #{tpu_custom_call.1} parent=1 // pred_fallthru
      _
    %v50 = vld [vmem:[#allocation2] sm:$0xff]
    %v51 = vld [vmem:[#allocation2 + $0x8] sm:$0xff]
    %v52 = vld [vmem:[#allocation2 + $0x10] sm:$0xff]
    %v53 = vld [vmem:[#allocation2 + $0x18] sm:$0xff]
    %v54 = vld [vmem:[#allocation2 + $0x20] sm:$0xff]
    %v55 = vld [vmem:[#allocation2 + $0x28] sm:$0xff]
    %v56 = vld [vmem:[#allocation2 + $0x30] sm:$0xff]
    %v57 = vld [vmem:[#allocation2 + $0x38] sm:$0xff]
    %v58 = vld [vmem:[#allocation5] sm:$0xf]
    %v59 = vld [vmem:[#allocation5 + $0x4] sm:$0xf]
    %v60 = vld [vmem:[#allocation5 + $0x8] sm:$0xf]
    %v61 = vld [vmem:[#allocation5 + $0xc] sm:$0xf]
    %v62 = vld [vmem:[#allocation5 + $0x10] sm:$0xf]
    %v63 = vld [vmem:[#allocation5 + $0x14] sm:$0xf]
    %v64 = vld [vmem:[#allocation5 + $0x18] sm:$0xf]
    %v65 = vld [vmem:[#allocation5 + $0x1c] sm:$0xf]
    %v66 = vld [vmem:[#allocation5 + $0x20] sm:$0xf]
    %v67 = vld [vmem:[#allocation5 + $0x24] sm:$0xf]
    %v68 = vld [vmem:[#allocation5 + $0x28] sm:$0xf]
    %v69 = vld [vmem:[#allocation5 + $0x2c] sm:$0xf]
    %v70 = vld [vmem:[#allocation5 + $0x30] sm:$0xf]
    %v71 = vld [vmem:[#allocation5 + $0x34] sm:$0xf]
    %v72 = vld [vmem:[#allocation5 + $0x38] sm:$0xf]
    %v73 = vld [vmem:[#allocation5 + $0x3c] sm:$0xf]
    %v74 = vld [vmem:[#allocation5 + $0x40] sm:$0xf]
    %v75 = vld [vmem:[#allocation5 + $0x44] sm:$0xf]
    %v76 = vld [vmem:[#allocation5 + $0x48] sm:$0xf]
    %v77 = vld [vmem:[#allocation5 + $0x4c] sm:$0xf]
    %v78 = vld [vmem:[#allocation5 + $0x50] sm:$0xf]
    %v79 = vld [vmem:[#allocation5 + $0x54] sm:$0xf]
    %v80 = vld [vmem:[#allocation5 + $0x58] sm:$0xf]
    %v81 = vld [vmem:[#allocation5 + $0x5c] sm:$0xf]
    %v82 = vld [vmem:[#allocation5 + $0x60] sm:$0xf]
    %v83 = vld [vmem:[#allocation5 + $0x64] sm:$0xf]
    %v84 = vld [vmem:[#allocation5 + $0x68] sm:$0xf]
    %v85 = vld [vmem:[#allocation5 + $0x6c] sm:$0xf]
    %v86 = vld [vmem:[#allocation5 + $0x70] sm:$0xf]
    %v87 = vld [vmem:[#allocation5 + $0x74] sm:$0xf]
    %v88 = vld [vmem:[#allocation5 + $0x78] sm:$0xf]
    %v89 = vld [vmem:[#allocation5 + $0x7c] sm:$0xf]
    %v90 = vld [vmem:[#allocation5 + $0x80] sm:$0xf]
    %v91 = vld [vmem:[#allocation5 + $0x84] sm:$0xf]
    %v92 = vld [vmem:[#allocation5 + $0x88] sm:$0xf]
    %v93 = vld [vmem:[#allocation5 + $0x8c] sm:$0xf]
    %v94 = vld [vmem:[#allocation5 + $0x90] sm:$0xf]
    %v95 = vld [vmem:[#allocation5 + $0x94] sm:$0xf]
    %v96 = vld [vmem:[#allocation5 + $0x98] sm:$0xf]
    %v97 = vld [vmem:[#allocation5 + $0x9c] sm:$0xf]
    %v98 = vld [vmem:[#allocation5 + $0xa0] sm:$0xf]
    %v99 = vld [vmem:[#allocation5 + $0xa4] sm:$0xf]
    %v100 = vld [vmem:[#allocation5 + $0xa8] sm:$0xf]
    %v101 = vld [vmem:[#allocation5 + $0xac] sm:$0xf]
    %v102 = vld [vmem:[#allocation5 + $0xb0] sm:$0xf]
    %v103 = vld [vmem:[#allocation5 + $0xb4] sm:$0xf]
    %v104 = vld [vmem:[#allocation5 + $0xb8] sm:$0xf]
    %v105 = vld [vmem:[#allocation5 + $0xbc] sm:$0xf]
    %v106 = vld [vmem:[#allocation5 + $0xc0] sm:$0xf]
    %v107 = vld [vmem:[#allocation5 + $0xc4] sm:$0xf]
    %v108 = vld [vmem:[#allocation5 + $0xc8] sm:$0xf]
    %v109 = vld [vmem:[#allocation5 + $0xcc] sm:$0xf]
    %v110 = vld [vmem:[#allocation5 + $0xd0] sm:$0xf]
    %v111 = vld [vmem:[#allocation5 + $0xd4] sm:$0xf]
    %v112 = vld [vmem:[#allocation5 + $0xd8] sm:$0xf]
    %v113 = vld [vmem:[#allocation5 + $0xdc] sm:$0xf]
    %v114 = vld [vmem:[#allocation5 + $0xe0] sm:$0xf]
    %v115 = vld [vmem:[#allocation5 + $0xe4] sm:$0xf]
    %v116 = vld [vmem:[#allocation5 + $0xe8] sm:$0xf]
    %v117 = vld [vmem:[#allocation5 + $0xec] sm:$0xf]
    %v118 = vld [vmem:[#allocation5 + $0xf0] sm:$0xf]
    %v119 = vld [vmem:[#allocation5 + $0xf4] sm:$0xf]
    %v120 = vld [vmem:[#allocation5 + $0xf8] sm:$0xf]
    %v121 = vld [vmem:[#allocation5 + $0xfc] sm:$0xf]
    %v122 = vld [vmem:[#allocation5 + $0x100] sm:$0xf]
    %v123 = vld [vmem:[#allocation5 + $0x104] sm:$0xf]
    %v124 = vld [vmem:[#allocation5 + $0x108] sm:$0xf]
    %v125 = vld [vmem:[#allocation5 + $0x10c] sm:$0xf]
    %v126 = vld [vmem:[#allocation5 + $0x110] sm:$0xf]
    %v127 = vld [vmem:[#allocation5 + $0x114] sm:$0xf]
    %v128 = vld [vmem:[#allocation5 + $0x118] sm:$0xf]
    %v129 = vld [vmem:[#allocation5 + $0x11c] sm:$0xf]
    %v130 = vld [vmem:[#allocation5 + $0x120] sm:$0xf]
    %v131 = vld [vmem:[#allocation5 + $0x124] sm:$0xf]
    %v132 = vld [vmem:[#allocation5 + $0x128] sm:$0xf]
    %v133 = vld [vmem:[#allocation5 + $0x12c] sm:$0xf]
    %v134 = vld [vmem:[#allocation5 + $0x130] sm:$0xf]
    %v135 = vld [vmem:[#allocation5 + $0x134] sm:$0xf]
    %v136 = vld [vmem:[#allocation5 + $0x138] sm:$0xf]
    %v137 = vld [vmem:[#allocation5 + $0x13c] sm:$0xf]
    %v138 = vld [vmem:[#allocation5 + $0x140] sm:$0xf]
    %v139 = vld [vmem:[#allocation5 + $0x144] sm:$0xf]
    %v140 = vld [vmem:[#allocation5 + $0x148] sm:$0xf]
    %v141 = vld [vmem:[#allocation5 + $0x14c] sm:$0xf]
    %v142 = vld [vmem:[#allocation5 + $0x150] sm:$0xf]
    %v143 = vld [vmem:[#allocation5 + $0x154] sm:$0xf]
    %v144 = vld [vmem:[#allocation5 + $0x158] sm:$0xf]
    %v145 = vld [vmem:[#allocation5 + $0x15c] sm:$0xf]
    %v146 = vld [vmem:[#allocation5 + $0x160] sm:$0xf]
    %v147 = vld [vmem:[#allocation5 + $0x164] sm:$0xf]
    %v148 = vld [vmem:[#allocation5 + $0x168] sm:$0xf]
    %v149 = vld [vmem:[#allocation5 + $0x16c] sm:$0xf]
    %v150 = vld [vmem:[#allocation5 + $0x170] sm:$0xf]
    %v151 = vld [vmem:[#allocation5 + $0x174] sm:$0xf]
    %v152 = vld [vmem:[#allocation5 + $0x178] sm:$0xf]
    %v153 = vld [vmem:[#allocation5 + $0x17c] sm:$0xf]
    %v154 = vld [vmem:[#allocation5 + $0x180] sm:$0xf]
    %v155 = vld [vmem:[#allocation5 + $0x184] sm:$0xf]
    %v156 = vld [vmem:[#allocation5 + $0x188] sm:$0xf]
    %v157 = vld [vmem:[#allocation5 + $0x18c] sm:$0xf]
    %v158 = vld [vmem:[#allocation5 + $0x190] sm:$0xf]
    %v159 = vld [vmem:[#allocation5 + $0x194] sm:$0xf]
    %v160 = vld [vmem:[#allocation5 + $0x198] sm:$0xf]
    %v161 = vld [vmem:[#allocation5 + $0x19c] sm:$0xf]
    %v162 = vld [vmem:[#allocation5 + $0x1a0] sm:$0xf]
    %v163 = vld [vmem:[#allocation5 + $0x1a4] sm:$0xf]
    %v164 = vld [vmem:[#allocation5 + $0x1a8] sm:$0xf]
    %v165 = vld [vmem:[#allocation5 + $0x1ac] sm:$0xf]
    %v166 = vld [vmem:[#allocation5 + $0x1b0] sm:$0xf]
    %v167 = vld [vmem:[#allocation5 + $0x1b4] sm:$0xf]
    %v168 = vld [vmem:[#allocation5 + $0x1b8] sm:$0xf]
    %v169 = vld [vmem:[#allocation5 + $0x1bc] sm:$0xf]
    %v170 = vld [vmem:[#allocation5 + $0x1c0] sm:$0xf]
    %v171 = vld [vmem:[#allocation5 + $0x1c4] sm:$0xf]
    %v172 = vld [vmem:[#allocation5 + $0x1c8] sm:$0xf]
    %v173 = vld [vmem:[#allocation5 + $0x1cc] sm:$0xf]
    %v174 = vld [vmem:[#allocation5 + $0x1d0] sm:$0xf]
    %v175 = vld [vmem:[#allocation5 + $0x1d4] sm:$0xf]
    %v176 = vld [vmem:[#allocation5 + $0x1d8] sm:$0xf]
    %v177 = vld [vmem:[#allocation5 + $0x1dc] sm:$0xf]
    %v178 = vld [vmem:[#allocation5 + $0x1e0] sm:$0xf]
    %v179 = vld [vmem:[#allocation5 + $0x1e4] sm:$0xf]
    %v180 = vld [vmem:[#allocation5 + $0x1e8] sm:$0xf]
    %v181 = vld [vmem:[#allocation5 + $0x1ec] sm:$0xf]
    %v182 = vld [vmem:[#allocation5 + $0x1f0] sm:$0xf]
    %v183 = vld [vmem:[#allocation5 + $0x1f4] sm:$0xf]
    %v184 = vld [vmem:[#allocation5 + $0x1f8] sm:$0xf]
    %v185 = vld [vmem:[#allocation5 + $0x1fc] sm:$0xf]
    %v194 = vunpack.c.l.b16 %v50
    %v195 = vunpack.c.h.b16 %v50
    %v196 = vunpack.c.l.b16 %v51
    %v197 = vunpack.c.h.b16 %v51
    %v198 = vunpack.c.l.b16 %v52
    %v199 = vunpack.c.h.b16 %v52
    %v200 = vunpack.c.l.b16 %v53
    %v201 = vunpack.c.h.b16 %v53
    %v202 = vunpack.c.l.b16 %v54
    %v203 = vunpack.c.h.b16 %v54
    %v204 = vunpack.c.l.b16 %v55
    %v205 = vunpack.c.h.b16 %v55
    %v206 = vunpack.c.l.b16 %v56
    %v207 = vunpack.c.h.b16 %v56
    %v208 = vunpack.c.l.b16 %v57
    %v209 = vunpack.c.h.b16 %v57
    %v210 = vpack.c.b16 %v202, %v194
    %v211 = vpack.c.b16 %v203, %v195
    %v212 = vpack.c.b16 %v204, %v196
    %v213 = vpack.c.b16 %v205, %v197
    %v214 = vpack.c.b16 %v206, %v198
    %v215 = vpack.c.b16 %v207, %v199
    %v216 = vpack.c.b16 %v208, %v200
    %v217 = vpack.c.b16 %v209, %v201
    %v354 = vunpack.c.l.b16 %v58
    %v355 = vunpack.c.l.b16 %v59
    %v356 = vunpack.c.l.b16 %v60
    %v357 = vunpack.c.l.b16 %v61
    %v358 = vunpack.c.l.b16 %v62
    %v359 = vunpack.c.l.b16 %v63
    %v360 = vunpack.c.l.b16 %v64
    %v361 = vunpack.c.l.b16 %v65
    %v362 = vunpack.c.l.b16 %v66
    %v363 = vunpack.c.l.b16 %v67
    %v364 = vunpack.c.l.b16 %v68
    %v365 = vunpack.c.l.b16 %v69
    %v366 = vunpack.c.l.b16 %v70
    %v367 = vunpack.c.l.b16 %v71
    %v368 = vunpack.c.l.b16 %v72
    %v369 = vunpack.c.l.b16 %v73
    %v370 = vunpack.c.l.b16 %v74
    %v371 = vunpack.c.l.b16 %v75
    %v372 = vunpack.c.l.b16 %v76
    %v373 = vunpack.c.l.b16 %v77
    %v374 = vunpack.c.l.b16 %v78
    %v375 = vunpack.c.l.b16 %v79
    %v376 = vunpack.c.l.b16 %v80
    %v377 = vunpack.c.l.b16 %v81
    %v378 = vunpack.c.l.b16 %v82
    %v379 = vunpack.c.l.b16 %v83
    %v380 = vunpack.c.l.b16 %v84
    %v381 = vunpack.c.l.b16 %v85
    %v382 = vunpack.c.l.b16 %v86
    %v383 = vunpack.c.l.b16 %v87
    %v384 = vunpack.c.l.b16 %v88
    %v385 = vunpack.c.l.b16 %v89
    %v386 = vunpack.c.l.b16 %v90
    %v387 = vunpack.c.l.b16 %v91
    %v388 = vunpack.c.l.b16 %v92
    %v389 = vunpack.c.l.b16 %v93
    %v390 = vunpack.c.l.b16 %v94
    %v391 = vunpack.c.l.b16 %v95
    %v392 = vunpack.c.l.b16 %v96
    %v393 = vunpack.c.l.b16 %v97
    %v394 = vunpack.c.l.b16 %v98
    %v395 = vunpack.c.l.b16 %v99
    %v396 = vunpack.c.l.b16 %v100
    %v397 = vunpack.c.l.b16 %v101
    %v398 = vunpack.c.l.b16 %v102
    %v399 = vunpack.c.l.b16 %v103
    %v400 = vunpack.c.l.b16 %v104
    %v401 = vunpack.c.l.b16 %v105
    %v402 = vunpack.c.l.b16 %v106
    %v403 = vunpack.c.l.b16 %v107
    %v404 = vunpack.c.l.b16 %v108
    %v405 = vunpack.c.l.b16 %v109
    %v406 = vunpack.c.l.b16 %v110
    %v407 = vunpack.c.l.b16 %v111
    %v408 = vunpack.c.l.b16 %v112
    %v409 = vunpack.c.l.b16 %v113
    %v410 = vunpack.c.l.b16 %v114
    %v411 = vunpack.c.l.b16 %v115
    %v412 = vunpack.c.l.b16 %v116
    %v413 = vunpack.c.l.b16 %v117
    %v414 = vunpack.c.l.b16 %v118
    %v415 = vunpack.c.l.b16 %v119
    %v416 = vunpack.c.l.b16 %v120
    %v417 = vunpack.c.l.b16 %v121
    %v418 = vunpack.c.l.b16 %v122
    %v419 = vunpack.c.l.b16 %v123
    %v420 = vunpack.c.l.b16 %v124
    %v421 = vunpack.c.l.b16 %v125
    %v422 = vunpack.c.l.b16 %v126
    %v423 = vunpack.c.l.b16 %v127
    %v424 = vunpack.c.l.b16 %v128
    %v425 = vunpack.c.l.b16 %v129
    %v426 = vunpack.c.l.b16 %v130
    %v427 = vunpack.c.l.b16 %v131
    %v428 = vunpack.c.l.b16 %v132
    %v429 = vunpack.c.l.b16 %v133
    %v430 = vunpack.c.l.b16 %v134
    %v431 = vunpack.c.l.b16 %v135
    %v432 = vunpack.c.l.b16 %v136
    %v433 = vunpack.c.l.b16 %v137
    %v434 = vunpack.c.l.b16 %v138
    %v435 = vunpack.c.l.b16 %v139
    %v436 = vunpack.c.l.b16 %v140
    %v437 = vunpack.c.l.b16 %v141
    %v438 = vunpack.c.l.b16 %v142
    %v439 = vunpack.c.l.b16 %v143
    %v440 = vunpack.c.l.b16 %v144
    %v441 = vunpack.c.l.b16 %v145
    %v442 = vunpack.c.l.b16 %v146
    %v443 = vunpack.c.l.b16 %v147
    %v444 = vunpack.c.l.b16 %v148
    %v445 = vunpack.c.l.b16 %v149
    %v446 = vunpack.c.l.b16 %v150
    %v447 = vunpack.c.l.b16 %v151
    %v448 = vunpack.c.l.b16 %v152
    %v449 = vunpack.c.l.b16 %v153
    %v450 = vunpack.c.l.b16 %v154
    %v451 = vunpack.c.l.b16 %v155
    %v452 = vunpack.c.l.b16 %v156
    %v453 = vunpack.c.l.b16 %v157
    %v454 = vunpack.c.l.b16 %v158
    %v455 = vunpack.c.l.b16 %v159
    %v456 = vunpack.c.l.b16 %v160
    %v457 = vunpack.c.l.b16 %v161
    %v458 = vunpack.c.l.b16 %v162
    %v459 = vunpack.c.l.b16 %v163
    %v460 = vunpack.c.l.b16 %v164
    %v461 = vunpack.c.l.b16 %v165
    %v462 = vunpack.c.l.b16 %v166
    %v463 = vunpack.c.l.b16 %v167
    %v464 = vunpack.c.l.b16 %v168
    %v465 = vunpack.c.l.b16 %v169
    %v466 = vunpack.c.l.b16 %v170
    %v467 = vunpack.c.l.b16 %v171
    %v468 = vunpack.c.l.b16 %v172
    %v469 = vunpack.c.l.b16 %v173
    %v470 = vunpack.c.l.b16 %v174
    %v471 = vunpack.c.l.b16 %v175
    %v472 = vunpack.c.l.b16 %v176
    %v473 = vunpack.c.l.b16 %v177
    %v474 = vunpack.c.l.b16 %v178
    %v475 = vunpack.c.l.b16 %v179
    %v476 = vunpack.c.l.b16 %v180
    %v477 = vunpack.c.l.b16 %v181
    %v478 = vunpack.c.l.b16 %v182
    %v479 = vunpack.c.l.b16 %v183
    %v480 = vunpack.c.l.b16 %v184
    %v481 = vunpack.c.l.b16 %v185
    %v482 = vpack.c.b16 %v355, %v354
    %v483 = vpack.c.b16 %v357, %v356
    %v484 = vpack.c.b16 %v359, %v358
    %v485 = vpack.c.b16 %v361, %v360
    %v486 = vpack.c.b16 %v363, %v362
    %v487 = vpack.c.b16 %v365, %v364
    %v488 = vpack.c.b16 %v367, %v366
    %v489 = vpack.c.b16 %v369, %v368
    %v490 = vpack.c.b16 %v371, %v370
    %v491 = vpack.c.b16 %v373, %v372
    %v492 = vpack.c.b16 %v375, %v374
    %v493 = vpack.c.b16 %v377, %v376
    %v494 = vpack.c.b16 %v379, %v378
    %v495 = vpack.c.b16 %v381, %v380
    %v496 = vpack.c.b16 %v383, %v382
    %v497 = vpack.c.b16 %v385, %v384
    %v498 = vpack.c.b16 %v387, %v386
    %v499 = vpack.c.b16 %v389, %v388
    %v500 = vpack.c.b16 %v391, %v390
    %v501 = vpack.c.b16 %v393, %v392
    %v502 = vpack.c.b16 %v395, %v394
    %v503 = vpack.c.b16 %v397, %v396
    %v504 = vpack.c.b16 %v399, %v398
    %v505 = vpack.c.b16 %v401, %v400
    %v506 = vpack.c.b16 %v403, %v402
    %v507 = vpack.c.b16 %v405, %v404
    %v508 = vpack.c.b16 %v407, %v406
    %v509 = vpack.c.b16 %v409, %v408
    %v510 = vpack.c.b16 %v411, %v410
    %v511 = vpack.c.b16 %v413, %v412
    %v512 = vpack.c.b16 %v415, %v414
    %v513 = vpack.c.b16 %v417, %v416
    %v514 = vpack.c.b16 %v419, %v418
    %v515 = vpack.c.b16 %v421, %v420
    %v516 = vpack.c.b16 %v423, %v422
    %v517 = vpack.c.b16 %v425, %v424
    %v518 = vpack.c.b16 %v427, %v426
    %v519 = vpack.c.b16 %v429, %v428
    %v520 = vpack.c.b16 %v431, %v430
    %v521 = vpack.c.b16 %v433, %v432
    %v522 = vpack.c.b16 %v435, %v434
    %v523 = vpack.c.b16 %v437, %v436
    %v524 = vpack.c.b16 %v439, %v438
    %v525 = vpack.c.b16 %v441, %v440
    %v526 = vpack.c.b16 %v443, %v442
    %v527 = vpack.c.b16 %v445, %v444
    %v528 = vpack.c.b16 %v447, %v446
    %v529 = vpack.c.b16 %v449, %v448
    %v530 = vpack.c.b16 %v451, %v450
    %v531 = vpack.c.b16 %v453, %v452
    %v532 = vpack.c.b16 %v455, %v454
    %v533 = vpack.c.b16 %v457, %v456
    %v534 = vpack.c.b16 %v459, %v458
    %v535 = vpack.c.b16 %v461, %v460
    %v536 = vpack.c.b16 %v463, %v462
    %v537 = vpack.c.b16 %v465, %v464
    %v538 = vpack.c.b16 %v467, %v466
    %v539 = vpack.c.b16 %v469, %v468
    %v540 = vpack.c.b16 %v471, %v470
    %v541 = vpack.c.b16 %v473, %v472
    %v542 = vpack.c.b16 %v475, %v474
    %v543 = vpack.c.b16 %v477, %v476
    %v544 = vpack.c.b16 %v479, %v478
    %v545 = vpack.c.b16 %v481, %v480
    %610 = vmatpush.bf16.msra.mxu0 %v489
    %611 = vmatpush.bf16.msra.mxu0 %v488
    %612 = vmatpush.bf16.msra.mxu0 %v487
    %613 = vmatpush.bf16.msra.mxu0 %v486
    %614 = vmatpush.bf16.msra.mxu0 %v485
    %615 = vmatpush.bf16.msra.mxu0 %v484
    %616 = vmatpush.bf16.msra.mxu0 %v483
    %617 = vmatpush.bf16.msra.mxu0 %v482
    %618 = vmatmul.bf16.gmra.mxu0 %v210
    %v619 = vpop.f32.mrf.mxu0
    %v620 = vadd.f32 0.0, %v619
    %v621 = vpop.f32.mrf.mxu0
    %v622 = vadd.f32 0.0, %v621
    %623 = vdwg.mxu0
    %624 = vmatpush.bf16.msra.mxu0 %v497
    %625 = vmatpush.bf16.msra.mxu0 %v496
    %626 = vmatpush.bf16.msra.mxu0 %v495
    %627 = vmatpush.bf16.msra.mxu0 %v494
    %628 = vmatpush.bf16.msra.mxu0 %v493
    %629 = vmatpush.bf16.msra.mxu0 %v492
    %630 = vmatpush.bf16.msra.mxu0 %v491
    %631 = vmatpush.bf16.msra.mxu0 %v490
    %632 = vmatmul.bf16.gmra.mxu0 %v211
    %v633 = vpop.f32.mrf.mxu0
    %v634 = vadd.f32 %v620, %v633
    %v635 = vpop.f32.mrf.mxu0
    %v636 = vadd.f32 %v622, %v635
    %637 = vdwg.mxu0
    %638 = vmatpush.bf16.msra.mxu0 %v505
    %639 = vmatpush.bf16.msra.mxu0 %v504
    %640 = vmatpush.bf16.msra.mxu0 %v503
    %641 = vmatpush.bf16.msra.mxu0 %v502
    %642 = vmatpush.bf16.msra.mxu0 %v501
    %643 = vmatpush.bf16.msra.mxu0 %v500
    %644 = vmatpush.bf16.msra.mxu0 %v499
    %645 = vmatpush.bf16.msra.mxu0 %v498
    %646 = vmatmul.bf16.gmra.mxu0 %v212
    %v647 = vpop.f32.mrf.mxu0
    %v648 = vadd.f32 %v634, %v647
    %v649 = vpop.f32.mrf.mxu0
    %v650 = vadd.f32 %v636, %v649
    %651 = vdwg.mxu0
    %652 = vmatpush.bf16.msra.mxu0 %v513
    %653 = vmatpush.bf16.msra.mxu0 %v512
    %654 = vmatpush.bf16.msra.mxu0 %v511
    %655 = vmatpush.bf16.msra.mxu0 %v510
    %656 = vmatpush.bf16.msra.mxu0 %v509
    %657 = vmatpush.bf16.msra.mxu0 %v508
    %658 = vmatpush.bf16.msra.mxu0 %v507
    %659 = vmatpush.bf16.msra.mxu0 %v506
    %660 = vmatmul.bf16.gmra.mxu0 %v213
    %v661 = vpop.f32.mrf.mxu0
    %v662 = vadd.f32 %v648, %v661
    %v663 = vpop.f32.mrf.mxu0
    %v664 = vadd.f32 %v650, %v663
    %665 = vdwg.mxu0
    %666 = vmatpush.bf16.msra.mxu0 %v521
    %667 = vmatpush.bf16.msra.mxu0 %v520
    %668 = vmatpush.bf16.msra.mxu0 %v519
    %669 = vmatpush.bf16.msra.mxu0 %v518
    %670 = vmatpush.bf16.msra.mxu0 %v517
    %671 = vmatpush.bf16.msra.mxu0 %v516
    %672 = vmatpush.bf16.msra.mxu0 %v515
    %673 = vmatpush.bf16.msra.mxu0 %v514
    %674 = vmatmul.bf16.gmra.mxu0 %v214
    %v675 = vpop.f32.mrf.mxu0
    %v676 = vadd.f32 %v662, %v675
    %v677 = vpop.f32.mrf.mxu0
    %v678 = vadd.f32 %v664, %v677
    %679 = vdwg.mxu0
    %680 = vmatpush.bf16.msra.mxu0 %v529
    %681 = vmatpush.bf16.msra.mxu0 %v528
    %682 = vmatpush.bf16.msra.mxu0 %v527
    %683 = vmatpush.bf16.msra.mxu0 %v526
    %684 = vmatpush.bf16.msra.mxu0 %v525
    %685 = vmatpush.bf16.msra.mxu0 %v524
    %686 = vmatpush.bf16.msra.mxu0 %v523
    %687 = vmatpush.bf16.msra.mxu0 %v522
    %688 = vmatmul.bf16.gmra.mxu0 %v215
    %v689 = vpop.f32.mrf.mxu0
    %v690 = vadd.f32 %v676, %v689
    %v691 = vpop.f32.mrf.mxu0
    %v692 = vadd.f32 %v678, %v691
    %693 = vdwg.mxu0
    %694 = vmatpush.bf16.msra.mxu0 %v537
    %695 = vmatpush.bf16.msra.mxu0 %v536
    %696 = vmatpush.bf16.msra.mxu0 %v535
    %697 = vmatpush.bf16.msra.mxu0 %v534
    %698 = vmatpush.bf16.msra.mxu0 %v533
    %699 = vmatpush.bf16.msra.mxu0 %v532
    %700 = vmatpush.bf16.msra.mxu0 %v531
    %701 = vmatpush.bf16.msra.mxu0 %v530
    %702 = vmatmul.bf16.gmra.mxu0 %v216
    %v703 = vpop.f32.mrf.mxu0
    %v704 = vadd.f32 %v690, %v703
    %v705 = vpop.f32.mrf.mxu0
    %v706 = vadd.f32 %v692, %v705
    %707 = vdwg.mxu0
    %708 = vmatpush.bf16.msra.mxu0 %v545
    %709 = vmatpush.bf16.msra.mxu0 %v544
    %710 = vmatpush.bf16.msra.mxu0 %v543
    %711 = vmatpush.bf16.msra.mxu0 %v542
    %712 = vmatpush.bf16.msra.mxu0 %v541
    %713 = vmatpush.bf16.msra.mxu0 %v540
    %714 = vmatpush.bf16.msra.mxu0 %v539
    %715 = vmatpush.bf16.msra.mxu0 %v538
    %716 = vmatmul.bf16.gmra.mxu0 %v217
    %v717 = vpop.f32.mrf.mxu0
    %v718 = vadd.f32 %v704, %v717
    %v719 = vpop.f32.mrf.mxu0
    %v720 = vadd.f32 %v706, %v719
    %721 = vdwg.mxu0
    %v722 = vld [vmem:[%s2] sm:$0x1]
    %v724 = vperm.slane %v722, 0
    %v726 = vmul.f32 %v718, %v724
    %v727 = vmul.f32 %v720, %v724
    %v728 = vld [vmem:[%s3] sm:$0x1]
    %v730 = vperm.slane %v728, 0
    %v732 = vadd.f32 %v726, %v730
    %v733 = vadd.f32 %v727, %v730
    %v734 = vmax.f32 %v732, 0.0
    %v735 = vmax.f32 %v733, 0.0
    %v736 = vpack.c.bf16 %v734, %v734
    %v737 = vpack.c.bf16 %v735, %v735
    %738 = vst [vmem:[#allocation7] sm:$0xf] %v736
    %739 = vst [vmem:[#allocation7 + $0x4] sm:$0xf] %v737
    // Predicated region
    $region26: #{tpu_custom_call.1} parent=1 // pred_check
      _
    $region27: #{tpu_custom_call.1} parent=1 // pred_check_branch
      %741 = sbr.rel (0) target = $region29
    $region28: #{tpu_custom_call.1} parent=1 // pred_region
      %743 = vsyncadd [#allocation4], 0
      %s744 = sshll.u32 [#allocation7], 4
      %s745 = int_to_ptr.vmem [resolvable:$true] %s744
      %s746 = sshll.u32 %s4, 4
      %s747 = int_to_ptr.hbm [resolvable:$true] %s746
      %752 = dma.vmem_to_hbm [thread:$0]  %s745, 128, %s747, [#allocation4], 64, 64, 4
    $region29: #{tpu_custom_call.1} parent=1 // pred_fallthru
      _
    // Predicated region
    $region30: #{tpu_custom_call.1} parent=1 // pred_check
      _
    $region31: #{tpu_custom_call.1} parent=1 // pred_check_branch
      %754 = sbr.rel (0) target = $region33
    $region32: #{tpu_custom_call.1} parent=1 // pred_region
      %756 = dma.done [#allocation4], 128
    $region33: #{tpu_custom_call.1} parent=1 // pred_fallthru
      _
    %757 = vsyncpa [#allocation3], 1
    %758 = vsyncpa [#allocation6], 1
    %759 = vsyncpa [#allocation4], 1

</llo_original>
